<compile_context>
chip_gen: v5e
topology: v5e:2x2
jax: 0.10.0
libtpu: 0.0.40
codegen_flags: <defaults>
</compile_context>

<pallas_src>
import math
from functools import partial

import jax
import jax.numpy as jnp
from jax import lax
from jax.experimental import pallas as pl
from jax.experimental.pallas import tpu as pltpu


# Matmul operand dtype. Keep f32 for the tiny test shapes / tight tolerance;
# switch to jnp.bfloat16 for realistic hidden sizes on v6e/v7x (accumulation
# stays f32 via preferred_element_type, h/c carries stay f32).
MXU_DTYPE = jnp.float32


# -----------------------------------------------------------------------------
# Kernel 1: BatchNorm1d batch statistics (gridded over batch tiles) ->
#           per-element (C, L) scale/shift maps.
# -----------------------------------------------------------------------------
def bn_stats_kernel(x_ref, gamma_ref, beta_ref, scale_ref, shift_ref,
                    sum_sc, sq_sc, *, n_total):
    eps = 1e-5
    i = pl.program_id(0)

    @pl.when(i == 0)
    def _init():
        sum_sc[...] = jnp.zeros_like(sum_sc)
        sq_sc[...] = jnp.zeros_like(sq_sc)

    x = x_ref[...]                                        # (Nb, C, L) batch tile
    sum_sc[...] += jnp.sum(x, axis=0)                     # (C, L) partial sums
    sq_sc[...] += jnp.sum(x * x, axis=0)                  # (C, L) partial sumsq

    @pl.when(i == pl.num_programs(0) - 1)
    def _finalize():
        C, L = sum_sc.shape
        cnt = float(n_total * L)                          # elements per channel
        s = jnp.sum(sum_sc[...], axis=1, keepdims=True)   # (C, 1)
        sq = jnp.sum(sq_sc[...], axis=1, keepdims=True)   # (C, 1)
        mean = s / cnt
        var = sq / cnt - mean * mean                      # biased (batch) variance
        scale = gamma_ref[...] * lax.rsqrt(var + eps)     # (C, 1)
        shift = beta_ref[...] - mean * scale              # (C, 1)
        scale_ref[...] = jnp.broadcast_to(scale, (C, L))
        shift_ref[...] = jnp.broadcast_to(shift, (C, L))


def bn_scale_shift(x, gamma_c1, beta_c1):
    N, C, L = x.shape
    nb = math.gcd(N, 8)                # batch tile size that divides N
    grid = (N // nb,)
    return pl.pallas_call(
        partial(bn_stats_kernel, n_total=N),
        out_shape=(jax.ShapeDtypeStruct((C, L), jnp.float32),
                   jax.ShapeDtypeStruct((C, L), jnp.float32)),
        grid_spec=pltpu.PrefetchScalarGridSpec(
            num_scalar_prefetch=0,
            grid=grid,
            in_specs=[
                pl.BlockSpec((nb, C, L), lambda i: (i, 0, 0)),
                pl.BlockSpec((C, 1), lambda i: (0, 0)),
                pl.BlockSpec((C, 1), lambda i: (0, 0)),
            ],
            out_specs=[
                pl.BlockSpec((C, L), lambda i: (0, 0)),
                pl.BlockSpec((C, L), lambda i: (0, 0)),
            ],
            scratch_shapes=[pltpu.VMEM((C, L), jnp.float32),
                            pltpu.VMEM((C, L), jnp.float32)],
        ),
        compiler_params=pltpu.CompilerParams(
            dimension_semantics=("arbitrary",)),          # reduction over batch
    )(x, gamma_c1, beta_c1)


# -----------------------------------------------------------------------------
# Kernel 2: fused BN-apply + LSTM + output Linear (single grid step).
#   x_ref   : (N, T, D)    scale_ref/shift_ref : (1, T, D)
#   wih_ref : (D, 4H)      whh_ref : (H, 4H)   b_ref : (1, 4H)
#   wout_ref: (H, O)       bout_ref: (1, O)    out_ref : (N, T, O)
#   gx_sc   : (T, N, 4H) VMEM   hs_sc : (T, N, H) VMEM
# -----------------------------------------------------------------------------
def lstm_head_kernel(x_ref, scale_ref, shift_ref, wih_ref, whh_ref, b_ref,
                     wout_ref, bout_ref, out_ref, gx_sc, hs_sc):
    N, T, D = x_ref.shape
    H = whh_ref.shape[0]
    O = wout_ref.shape[1]
    G = 4 * H

    # ---- BN apply + hoisted input projection: ONE (T*N, D) @ (D, 4H) matmul ----
    xb = x_ref[...] * scale_ref[...] + shift_ref[...]              # (N, T, D)
    xb_t = pltpu.einshape("ntd->tnd", xb)                          # t-major relayout
    gx = jnp.dot(xb_t.reshape(T * N, D).astype(MXU_DTYPE),
                 wih_ref[...].astype(MXU_DTYPE),
                 preferred_element_type=jnp.float32) + b_ref[...]  # (T*N, 4H)
    gx_sc[...] = gx.reshape(T, N, G)                               # one contiguous store

    # ---- sequential recurrence: only h @ W_hh inside the time loop ----
    whh = whh_ref[...].astype(MXU_DTYPE)

    def step(t, carry):
        h, c = carry
        gates = gx_sc[t] + jnp.dot(h.astype(MXU_DTYPE), whh,
                                   preferred_element_type=jnp.float32)   # (N, 4H)
        # TODO(synk): for realistic configs pad H to a multiple of 128 so these
        # gate slices land on 128-lane boundaries.
        i_g = jax.nn.sigmoid(gates[:, 0 * H:1 * H])
        f_g = jax.nn.sigmoid(gates[:, 1 * H:2 * H])
        g_g = jnp.tanh(gates[:, 2 * H:3 * H])
        o_g = jax.nn.sigmoid(gates[:, 3 * H:4 * H])
        c_new = f_g * c + i_g * g_g
        h_new = o_g * jnp.tanh(c_new)
        hs_sc[t] = h_new
        return (h_new, c_new)

    h0 = jnp.zeros((N, H), jnp.float32)
    c0 = jnp.zeros((N, H), jnp.float32)
    # Full unroll only for small T; modest unroll for long sequences.
    lax.fori_loop(0, T, step, (h0, c0), unroll=True if T <= 8 else 4)

    # ---- hoisted output Linear: ONE (T*N, H) @ (H, O) matmul, single store ----
    y = jnp.dot(hs_sc[...].reshape(T * N, H).astype(MXU_DTYPE),
                wout_ref[...].astype(MXU_DTYPE),
                preferred_element_type=jnp.float32) + bout_ref[...]      # (T*N, O)
    out_ref[...] = pltpu.einshape("tno->nto",
                                  y.reshape(T, N, O)).astype(out_ref.dtype)
    # TODO(synk): for realistic O pad the output lane dim to a multiple of 128
    # (lane-dense store) and chunk T so gx/hs scratch fits v7x's 64 MiB VMEM.


def lstm_head(x_seq, scale_td, shift_td, w_ih_t, w_hh_t, b, w_out_t, b_out):
    N, T, D = x_seq.shape
    H = w_hh_t.shape[0]
    O = w_out_t.shape[1]
    return pl.pallas_call(
        lstm_head_kernel,
        out_shape=jax.ShapeDtypeStruct((N, T, O), jnp.float32),
        scratch_shapes=[
            pltpu.VMEM((T, N, 4 * H), jnp.float32),   # hoisted input-projection gates
            pltpu.VMEM((T, N, H), jnp.float32),       # hidden states for output head
        ],
        compiler_params=pltpu.CompilerParams(vmem_limit_bytes=32 * 1024 * 1024),
    )(x_seq, scale_td, shift_td, w_ih_t, w_hh_t, b, w_out_t, b_out)


# -----------------------------------------------------------------------------
# Full forward (reshape glue in plain JAX; all compute in Pallas)
# -----------------------------------------------------------------------------
def rnn_forward(x, params, input_size):
    N, C, L = x.shape
    D = input_size
    T = (C * L) // D
    gamma = params["gamma"].reshape(C, 1)
    beta = params["beta"].reshape(C, 1)
    # BN folded to per-element scale/shift (general channel -> (t, d) mapping).
    scale_cl, shift_cl = bn_scale_shift(x, gamma, beta)
    scale_td = scale_cl.reshape(1, T, D)
    shift_td = shift_cl.reshape(1, T, D)
    x_seq = x.reshape(N, T, D)
    return lstm_head(x_seq, scale_td, shift_td,
                     params["w_ih_t"], params["w_hh_t"], params["b"],
                     params["w_out_t"], params["b_out"])


# -----------------------------------------------------------------------------
# Pure-JAX reference for verification
# -----------------------------------------------------------------------------
def rnn_reference(x, params, input_size):
    eps = 1e-5
    mean = jnp.mean(x, axis=(0, 2), keepdims=True)
    var = jnp.mean((x - mean) ** 2, axis=(0, 2), keepdims=True)
    x = (x - mean) / jnp.sqrt(var + eps) * params["gamma"] + params["beta"]
    N = x.shape[0]
    x = x.reshape(N, -1, input_size)
    T = x.shape[1]
    H = params["w_hh_t"].shape[0]
    h = jnp.zeros((N, H), jnp.float32)
    c = jnp.zeros((N, H), jnp.float32)
    outs = []
    for t in range(T):
        gates = x[:, t, :] @ params["w_ih_t"] + h @ params["w_hh_t"] + params["b"]
        i = jax.nn.sigmoid(gates[:, 0 * H:1 * H])
        f = jax.nn.sigmoid(gates[:, 1 * H:2 * H])
        g = jnp.tanh(gates[:, 2 * H:3 * H])
        o = jax.nn.sigmoid(gates[:, 3 * H:4 * H])
        c = f * c + i * g
        h = o * jnp.tanh(c)
        outs.append(h @ params["w_out_t"] + params["b_out"])
    return jnp.stack(outs, axis=1)


if __name__ == "__main__":
    # Shapes consistent with the module:
    #   bn_config     -> BatchNorm1d(num_features=C)
    #   lstm_config   -> LSTM(input_size=16, hidden_size=32, batch_first=True)
    #   output_config -> Linear(32, 8)
    N, C, L = 2, 4, 16
    INPUT_SIZE, HIDDEN, OUT = 16, 32, 8      # T = C*L // INPUT_SIZE = 4

    key = jax.random.PRNGKey(0)
    k = jax.random.split(key, 8)

    x = jax.random.normal(k[0], (N, C, L), jnp.float32)

    s = 1.0 / jnp.sqrt(HIDDEN)
    params = {
        # BatchNorm1d affine params
        "gamma": jnp.ones((1, C, 1), jnp.float32),
        "beta": jnp.zeros((1, C, 1), jnp.float32),
        # LSTM weights (PyTorch layout transposed for row-major matmul);
        # gate order i, f, g, o; b = b_ih + b_hh
        "w_ih_t": jax.random.uniform(k[1], (INPUT_SIZE, 4 * HIDDEN), jnp.float32, -s, s),
        "w_hh_t": jax.random.uniform(k[2], (HIDDEN, 4 * HIDDEN), jnp.float32, -s, s),
        "b": jax.random.uniform(k[3], (1, 4 * HIDDEN), jnp.float32, -s, s)
             + jax.random.uniform(k[4], (1, 4 * HIDDEN), jnp.float32, -s, s),
        # Output Linear
        "w_out_t": jax.random.uniform(k[5], (HIDDEN, OUT), jnp.float32, -s, s),
        "b_out": jax.random.uniform(k[6], (1, OUT), jnp.float32, -s, s),
    }

    out = rnn_forward(x, params, INPUT_SIZE)
    out = jax.block_until_ready(out)

    ref = rnn_reference(x, params, INPUT_SIZE)
    assert out.shape == (N, C * L // INPUT_SIZE, OUT), out.shape
    assert jnp.allclose(out, ref, atol=1e-4, rtol=1e-4), \
        f"max err {jnp.max(jnp.abs(out - ref))}"

    print("KERNEL_OK")
</pallas_src>

<mosaic_0001>
module attributes {stable_mosaic.version = 11 : i64} {
  func.func @bn_stats_kernel(%arg0: i32, %arg1: memref<2x4x16xf32, #tpu.memory_space<vmem>>, %arg2: memref<4x1xf32, #tpu.memory_space<vmem>>, %arg3: memref<4x1xf32, #tpu.memory_space<vmem>>, %arg4: memref<4x16xf32, #tpu.memory_space<vmem>>, %arg5: memref<4x16xf32, #tpu.memory_space<vmem>>, %arg6: memref<4x16xf32, #tpu.memory_space<vmem>>, %arg7: memref<4x16xf32, #tpu.memory_space<vmem>>) attributes {dimension_semantics = [#tpu.dimension_semantics<arbitrary>], iteration_bounds = array<i64: 1>, scalar_prefetch = 0 : i64, scratch_operands = 2 : i64, tpu.core_type = #tpu.core_type<tc>, window_params = [{transform_indices = @transform_0, window_bounds = array<i64: 2, 4, 16>}, {pipeline_mode = #tpu.pipeline_mode<synchronous>, transform_indices = @transform_1, window_bounds = array<i64: 4, 1>}, {pipeline_mode = #tpu.pipeline_mode<synchronous>, transform_indices = @transform_2, window_bounds = array<i64: 4, 1>}, {pipeline_mode = #tpu.pipeline_mode<synchronous>, transform_indices = @transform_3, window_bounds = array<i64: 4, 16>}, {pipeline_mode = #tpu.pipeline_mode<synchronous>, transform_indices = @transform_4, window_bounds = array<i64: 4, 16>}]} {
    %c0_i32 = arith.constant 0 : i32
    %0 = arith.cmpi eq, %arg0, %c0_i32 : i32
    %1 = arith.extui %0 : i1 to i32
    %c0_i32_0 = arith.constant 0 : i32
    %2 = arith.cmpi ne, %1, %c0_i32_0 : i32
    scf.if %2 {
      %cst_14 = arith.constant 0.000000e+00 : f32
      %16 = vector.broadcast %cst_14 : f32 to vector<4x16xf32>
      %c0_15 = arith.constant 0 : index
      %c0_16 = arith.constant 0 : index
      %17 = vector.load %arg6[%c0_15, %c0_16] : memref<4x16xf32, #tpu.memory_space<vmem>>, vector<4x16xf32>
      tpu.vector_store %arg6[%c0_15, %c0_16], %16 {strides = array<i32>} : memref<4x16xf32, #tpu.memory_space<vmem>>, vector<4x16xf32>,
      %cst_17 = arith.constant 0.000000e+00 : f32
      %18 = vector.broadcast %cst_17 : f32 to vector<4x16xf32>
      %c0_18 = arith.constant 0 : index
      %c0_19 = arith.constant 0 : index
      %19 = vector.load %arg7[%c0_18, %c0_19] : memref<4x16xf32, #tpu.memory_space<vmem>>, vector<4x16xf32>
      tpu.vector_store %arg7[%c0_18, %c0_19], %18 {strides = array<i32>} : memref<4x16xf32, #tpu.memory_space<vmem>>, vector<4x16xf32>,
    } else {
    }
    %c0 = arith.constant 0 : index
    %c0_1 = arith.constant 0 : index
    %c0_2 = arith.constant 0 : index
    %3 = vector.load %arg1[%c0, %c0_1, %c0_2] : memref<2x4x16xf32, #tpu.memory_space<vmem>>, vector<2x4x16xf32>
    %c0_3 = arith.constant 0 : index
    %c0_4 = arith.constant 0 : index
    %4 = vector.load %arg6[%c0_3, %c0_4] : memref<4x16xf32, #tpu.memory_space<vmem>>, vector<4x16xf32>
    %cst = arith.constant dense<0.000000e+00> : vector<4x16xf32>
    %5 = vector.multi_reduction <add>, %3, %cst [0] : vector<2x4x16xf32> to vector<4x16xf32>
    %6 = arith.addf %4, %5 : vector<4x16xf32>
    %c0_5 = arith.constant 0 : index
    %c0_6 = arith.constant 0 : index
    %7 = vector.load %arg6[%c0_5, %c0_6] : memref<4x16xf32, #tpu.memory_space<vmem>>, vector<4x16xf32>
    tpu.vector_store %arg6[%c0_5, %c0_6], %6 {strides = array<i32>} : memref<4x16xf32, #tpu.memory_space<vmem>>, vector<4x16xf32>,
    %c0_7 = arith.constant 0 : index
    %c0_8 = arith.constant 0 : index
    %8 = vector.load %arg7[%c0_7, %c0_8] : memref<4x16xf32, #tpu.memory_space<vmem>>, vector<4x16xf32>
    %9 = arith.mulf %3, %3 : vector<2x4x16xf32>
    %cst_9 = arith.constant dense<0.000000e+00> : vector<4x16xf32>
    %10 = vector.multi_reduction <add>, %9, %cst_9 [0] : vector<2x4x16xf32> to vector<4x16xf32>
    %11 = arith.addf %8, %10 : vector<4x16xf32>
    %c0_10 = arith.constant 0 : index
    %c0_11 = arith.constant 0 : index
    %12 = vector.load %arg7[%c0_10, %c0_11] : memref<4x16xf32, #tpu.memory_space<vmem>>, vector<4x16xf32>
    tpu.vector_store %arg7[%c0_10, %c0_11], %11 {strides = array<i32>} : memref<4x16xf32, #tpu.memory_space<vmem>>, vector<4x16xf32>,
    %c0_i32_12 = arith.constant 0 : i32
    %13 = arith.cmpi eq, %arg0, %c0_i32_12 : i32
    %14 = arith.extui %13 : i1 to i32
    %c0_i32_13 = arith.constant 0 : i32
    %15 = arith.cmpi ne, %14, %c0_i32_13 : i32
    scf.if %15 {
      %c0_14 = arith.constant 0 : index
      %c0_15 = arith.constant 0 : index
      %16 = vector.load %arg6[%c0_14, %c0_15] : memref<4x16xf32, #tpu.memory_space<vmem>>, vector<4x16xf32>
      %cst_16 = arith.constant dense<0.000000e+00> : vector<4xf32>
      %17 = vector.multi_reduction <add>, %16, %cst_16 [1] : vector<4x16xf32> to vector<4xf32>
      %18 = vector.shape_cast %17 : vector<4xf32> to vector<4x1xf32>
      %c0_17 = arith.constant 0 : index
      %c0_18 = arith.constant 0 : index
      %19 = vector.load %arg7[%c0_17, %c0_18] : memref<4x16xf32, #tpu.memory_space<vmem>>, vector<4x16xf32>
      %cst_19 = arith.constant dense<0.000000e+00> : vector<4xf32>
      %20 = vector.multi_reduction <add>, %19, %cst_19 [1] : vector<4x16xf32> to vector<4xf32>
      %21 = vector.shape_cast %20 : vector<4xf32> to vector<4x1xf32>
      %cst_20 = arith.constant 3.200000e+01 : f32
      %22 = vector.broadcast %cst_20 : f32 to vector<4x1xf32>
      %23 = arith.divf %18, %22 : vector<4x1xf32>
      %cst_21 = arith.constant 3.200000e+01 : f32
      %24 = vector.broadcast %cst_21 : f32 to vector<4x1xf32>
      %25 = arith.divf %21, %24 : vector<4x1xf32>
      %26 = arith.mulf %23, %23 : vector<4x1xf32>
      %27 = arith.subf %25, %26 : vector<4x1xf32>
      %c0_22 = arith.constant 0 : index
      %c0_23 = arith.constant 0 : index
      %28 = vector.load %arg2[%c0_22, %c0_23] : memref<4x1xf32, #tpu.memory_space<vmem>>, vector<4x1xf32>
      %cst_24 = arith.constant 9.99999974E-6 : f32
      %29 = vector.broadcast %cst_24 : f32 to vector<4x1xf32>
      %30 = arith.addf %27, %29 : vector<4x1xf32>
      %31 = math.rsqrt %30 : vector<4x1xf32>
      %32 = arith.mulf %28, %31 : vector<4x1xf32>
      %c0_25 = arith.constant 0 : index
      %c0_26 = arith.constant 0 : index
      %33 = vector.load %arg3[%c0_25, %c0_26] : memref<4x1xf32, #tpu.memory_space<vmem>>, vector<4x1xf32>
      %34 = arith.mulf %23, %32 : vector<4x1xf32>
      %35 = arith.subf %33, %34 : vector<4x1xf32>
      %36 = vector.shape_cast %32 : vector<4x1xf32> to vector<4x1xf32>
      %37 = vector.broadcast %36 : vector<4x1xf32> to vector<4x16xf32>
      %c0_27 = arith.constant 0 : index
      %c0_28 = arith.constant 0 : index
      %38 = vector.load %arg4[%c0_27, %c0_28] : memref<4x16xf32, #tpu.memory_space<vmem>>, vector<4x16xf32>
      tpu.vector_store %arg4[%c0_27, %c0_28], %37 {strides = array<i32>} : memref<4x16xf32, #tpu.memory_space<vmem>>, vector<4x16xf32>,
      %39 = vector.shape_cast %35 : vector<4x1xf32> to vector<4x1xf32>
      %40 = vector.broadcast %39 : vector<4x1xf32> to vector<4x16xf32>
      %c0_29 = arith.constant 0 : index
      %c0_30 = arith.constant 0 : index
      %41 = vector.load %arg5[%c0_29, %c0_30] : memref<4x16xf32, #tpu.memory_space<vmem>>, vector<4x16xf32>
      tpu.vector_store %arg5[%c0_29, %c0_30], %40 {strides = array<i32>} : memref<4x16xf32, #tpu.memory_space<vmem>>, vector<4x16xf32>,
    } else {
    }
    return
  }
  func.func @transform_0(%arg0: i32) -> (i32, i32, i32) {
    %c0_i32 = arith.constant 0 : i32
    %c0_i32_0 = arith.constant 0 : i32
    %c0_i32_1 = arith.constant 0 : i32
    return %arg0, %c0_i32, %c0_i32_0 : i32, i32, i32
  }
  func.func @transform_1(%arg0: i32) -> (i32, i32) {
    %c0_i32 = arith.constant 0 : i32
    %c0_i32_0 = arith.constant 0 : i32
    %c0_i32_1 = arith.constant 0 : i32
    return %c0_i32, %c0_i32_0 : i32, i32
  }
  func.func @transform_2(%arg0: i32) -> (i32, i32) {
    %c0_i32 = arith.constant 0 : i32
    %c0_i32_0 = arith.constant 0 : i32
    %c0_i32_1 = arith.constant 0 : i32
    return %c0_i32, %c0_i32_0 : i32, i32
  }
  func.func @transform_3(%arg0: i32) -> (i32, i32) {
    %c0_i32 = arith.constant 0 : i32
    %c0_i32_0 = arith.constant 0 : i32
    %c0_i32_1 = arith.constant 0 : i32
    return %c0_i32, %c0_i32_0 : i32, i32
  }
  func.func @transform_4(%arg0: i32) -> (i32, i32) {
    %c0_i32 = arith.constant 0 : i32
    %c0_i32_0 = arith.constant 0 : i32
    %c0_i32_1 = arith.constant 0 : i32
    return %c0_i32, %c0_i32_0 : i32, i32
  }
}

</mosaic_0001>

<llo_original>
// kernel: tpu_custom_call.1
$region0: #{tpu_custom_call.1}
  #allocation0 [shape = 'u32[]', space=smem, size = 0x4, offset = 0x4, fixed_abs, tag = 'smem constant byte address 0x4 - core index']
  #allocation1 [shape = 'u32[72,128]{1,0:T(1,128)}', space=vmem, size = 0x9000, scoped, tag = 'internal scratch']
  #allocation2 [shape = 'f32[4,16]{1,0:T(4,128)}', space=vmem, size = 0x800, scoped, tag = 'scratch operand']
  #allocation3 [shape = 'f32[4,16]{1,0:T(4,128)}', space=vmem, size = 0x800, scoped, tag = 'scratch operand']
  %s0 = inlined_call_operand.vmem [shape: f32[2,4,16], index: 0, kind: input, shape index: {}]
  %s1 = inlined_call_operand.vmem [shape: f32[4,1], index: 1, kind: input, shape index: {}]
  %s2 = inlined_call_operand.vmem [shape: f32[4,1], index: 2, kind: input, shape index: {}]
  %s3 = inlined_call_operand.hbm [shape: f32[4,16], index: 3, kind: output, shape index: {0}]
  %s4 = inlined_call_operand.hbm [shape: f32[4,16], index: 4, kind: output, shape index: {1}]
  %5 = xla_tuple %s3, %s4
  %s6 = sld [smem:[#allocation0]]
  $region38: #{tpu_custom_call.1} parent=0
    _
  %s8 = ssub.s32 1, %s6
  %s9 = scalar_select 0, %s8, %s6
  $region1: #{tpu_custom_call.1} parent=0
    #allocation4 [shape = 'u8[2048]{0}', space=vmem, size = 0x800, scoped, tag = 'output window, operand 0, single buffered']
    #allocation5 [shape = 's32[1]{0}', space=sflag, size = 0x4, scoped, tag = 'scoped memory for tpu_custom_call.1']
    #allocation6 [shape = 'u8[2048]{0}', space=vmem, size = 0x800, scoped, tag = 'output window, operand 1, single buffered']
    #allocation7 [shape = 's32[1]{0}', space=sflag, size = 0x4, scoped, tag = 'scoped memory for tpu_custom_call.1']
    %10 = vsyncpa [#allocation5], 0
    %11 = vsyncpa [#allocation7], 0
    // Predicated region
    $region2: #{tpu_custom_call.1} parent=1 // pred_check
      _
    $region3: #{tpu_custom_call.1} parent=1 // pred_check_branch
      %13 = sbr.rel (0) target = $region5
    $region4: #{tpu_custom_call.1} parent=1 // pred_region
      _
    $region5: #{tpu_custom_call.1} parent=1 // pred_fallthru
      _
    // Predicated region
    $region6: #{tpu_custom_call.1} parent=1 // pred_check
      _
    $region7: #{tpu_custom_call.1} parent=1 // pred_check_branch
      %15 = sbr.rel (0) target = $region9
    $region8: #{tpu_custom_call.1} parent=1 // pred_region
      _
    $region9: #{tpu_custom_call.1} parent=1 // pred_fallthru
      _
    // Predicated region
    $region10: #{tpu_custom_call.1} parent=1 // pred_check
      _
    $region11: #{tpu_custom_call.1} parent=1 // pred_check_branch
      %17 = sbr.rel (0) target = $region13
    $region12: #{tpu_custom_call.1} parent=1 // pred_region
      _
    $region13: #{tpu_custom_call.1} parent=1 // pred_fallthru
      _
    %p18 = scmp.eq.s32.totalorder 0, 0
    // Predicated region
    $region14: #{tpu_custom_call.1} parent=1 // pred_check
      %p19 = pneg %p18
    $region15: #{tpu_custom_call.1} parent=1 // pred_check_branch
      %21 = sbr.rel (%p19) target = $region17
    $region16: #{tpu_custom_call.1} parent=1 // pred_region
      %vm22 = vcmask 125952
      %23 = vst.msk [vmem:[#allocation2] sm:$0xf] %vm22, 0.0
      %24 = vst.msk [vmem:[#allocation3] sm:$0xf] %vm22, 0.0
    $region17: #{tpu_custom_call.1} parent=1 // pred_fallthru
      _
    %v25 = vld [vmem:[%s0] sm:$0xf]
    %v26 = vld [vmem:[%s0 + $0x4] sm:$0xf]
    %v27 = vld [vmem:[#allocation2] sm:$0xf]
    %vm28 = vcmask 125952
    %v29 = vsel %vm28, %v25, 0.0
    %v30 = vsel %vm28, %v26, 0.0
    %v31 = vadd.f32 %v29, %v30
    %v32 = vadd.f32 %v27, %v31
    %33 = vst.msk [vmem:[#allocation2] sm:$0xf] %vm28, %v32
    %v34 = vld [vmem:[#allocation3] sm:$0xf]
    %v35 = vmul.f32 %v25, %v25
    %v36 = vmul.f32 %v26, %v26
    %v37 = vsel %vm28, %v35, 0.0
    %v38 = vsel %vm28, %v36, 0.0
    %v39 = vadd.f32 %v37, %v38
    %v40 = vadd.f32 %v34, %v39
    %41 = vst.msk [vmem:[#allocation3] sm:$0xf] %vm28, %v40
    // Predicated region
    $region18: #{tpu_custom_call.1} parent=1 // pred_check
      %p42 = pneg %p18
    $region19: #{tpu_custom_call.1} parent=1 // pred_check_branch
      %44 = sbr.rel (%p42) target = $region21
    $region20: #{tpu_custom_call.1} parent=1 // pred_region
      %v45 = vld [vmem:[#allocation2] sm:$0xf]
      %v46 = vsel %vm28, %v45, 0.0
      %47 = vadd.xlane.f32.xlu0 %v46
      %v48 = vpop.xlane.xlu0 %47
      %v49 = vld [vmem:[#allocation3] sm:$0xf]
      %v50 = vsel %vm28, %v49, 0.0
      %51 = vadd.xlane.f32.xlu0 %v50
      %v52 = vpop.xlane.xlu0 %51
      %v53 = vrcp.pop 32.0
      %v54 = vmul.f32 32.0, %v53
      %v55 = vsub.f32 1.0, %v54
      %v56 = vmul.f32 %v53, %v55
      %v57 = vadd.f32 %v53, %v56
      %vm58 = vweird.f32 %v53
      %v59 = vsel %vm58, %v53, %v57
      %v60 = vmul.f32 %v48, %v59
      %v61 = vmul.f32 %v52, %v59
      %v62 = vmul.f32 %v60, %v60
      %v63 = vsub.f32 %v61, %v62
      %v64 = vld [vmem:[%s1] sm:$0xf]
      %v65 = vadd.f32 %v63, 1e-05
      %v66 = vrsqrt.pop %v65
      %v67 = vmul.f32 %v66, %v65
      %v68 = vmul.f32 %v67, %v66
      %v69 = vmul.f32 0.5, %v68
      %v70 = vsub.f32 1.5, %v69
      %v71 = vmul.f32 %v66, %v70
      %vm72 = vweird.f32 %v65
      %vm73 = vweird.f32 %v66
      %vm74 = vmor %vm72, %vm73
      %v75 = vsel %vm74, %v66, %v71
      %v76 = vmul.f32 %v64, %v75
      %v77 = vld [vmem:[%s2] sm:$0xf]
      %v78 = vmul.f32 %v60, %v76
      %v79 = vsub.f32 %v77, %v78
      %81 = vset.pattern.permute.xlu0 0
      %82 = vperm.xlu0 %81, %v76
      %v83 = vpop.permute.xlu0 %82
      %85 = vst.msk [vmem:[#allocation4] sm:$0xf] %vm28, %v83
      %87 = vset.pattern.permute.xlu0 0
      %88 = vperm.xlu0 %87, %v79
      %v89 = vpop.permute.xlu0 %88
      %91 = vst.msk [vmem:[#allocation6] sm:$0xf] %vm28, %v89
    $region21: #{tpu_custom_call.1} parent=1 // pred_fallthru
      _
    // Predicated region
    $region22: #{tpu_custom_call.1} parent=1 // pred_check
      _
    $region23: #{tpu_custom_call.1} parent=1 // pred_check_branch
      %93 = sbr.rel (0) target = $region25
    $region24: #{tpu_custom_call.1} parent=1 // pred_region
      %95 = vsyncadd [#allocation5], 0
      %s97 = sshll.u32 [#allocation4], 4
      %s98 = int_to_ptr.vmem [resolvable:$true] %s97
      %s99 = sshll.u32 %s3, 4
      %s100 = int_to_ptr.hbm [resolvable:$true] %s99
      %102 = dma.vmem_to_hbm [thread:$0]  %s98, 64, %s100, [#allocation5]
    $region25: #{tpu_custom_call.1} parent=1 // pred_fallthru
      _
    // Predicated region
    $region26: #{tpu_custom_call.1} parent=1 // pred_check
      _
    $region27: #{tpu_custom_call.1} parent=1 // pred_check_branch
      %104 = sbr.rel (0) target = $region29
    $region28: #{tpu_custom_call.1} parent=1 // pred_region
      %106 = vsyncadd [#allocation7], 0
      %s108 = sshll.u32 [#allocation6], 4
      %s109 = int_to_ptr.vmem [resolvable:$true] %s108
      %s110 = sshll.u32 %s4, 4
      %s111 = int_to_ptr.hbm [resolvable:$true] %s110
      %113 = dma.vmem_to_hbm [thread:$0]  %s109, 64, %s111, [#allocation7]
    $region29: #{tpu_custom_call.1} parent=1 // pred_fallthru
      _
    // Predicated region
    $region30: #{tpu_custom_call.1} parent=1 // pred_check
      _
    $region31: #{tpu_custom_call.1} parent=1 // pred_check_branch
      %115 = sbr.rel (0) target = $region33
    $region32: #{tpu_custom_call.1} parent=1 // pred_region
      %117 = dma.done [#allocation5], 64
    $region33: #{tpu_custom_call.1} parent=1 // pred_fallthru
      _
    // Predicated region
    $region34: #{tpu_custom_call.1} parent=1 // pred_check
      _
    $region35: #{tpu_custom_call.1} parent=1 // pred_check_branch
      %119 = sbr.rel (0) target = $region37
    $region36: #{tpu_custom_call.1} parent=1 // pred_region
      %121 = dma.done [#allocation7], 64
    $region37: #{tpu_custom_call.1} parent=1 // pred_fallthru
      _
    %122 = vsyncpa [#allocation5], 1
    %123 = vsyncpa [#allocation7], 1

</llo_original>
